<compile_context>
chip_gen: v7x
topology: tpu7x:2x2x1
jax: 0.10.0
libtpu: 0.0.40
codegen_flags: <defaults>
</compile_context>

<pallas_src>
import functools

import jax
import jax.numpy as jnp
from jax import lax
from jax.experimental import pallas as pl
from jax.experimental.pallas import tpu as pltpu

_LANE = 128
_SUB = 8


def _color_transform_kernel(img_ref, tbl_ref, out_ref, *, cp, chunk):
    """One grid step handles a (NC_pad, TILE) pixel block.

    img_ref : (NC_pad, TILE)  pixel values (roughly in [0, 1))
    tbl_ref : (NC_pad, CP)    col 0 = bias, col k (k >= 1) = c_{k-1} (second differences)
    out_ref : (NC_pad, TILE)
    """
    scale = float(cp - 1)
    # Hoisted out of the chunk loop: read the per-row scalars once per grid step.
    bias = tbl_ref[:, 0:1]                                    # (NC, 1)
    coeffs = [tbl_ref[:, k:k + 1] for k in range(1, cp)]      # (CP-1) x (NC, 1)
    n_chunks = img_ref.shape[1] // chunk

    def body(c, carry):
        start = pl.multiple_of(c * chunk, _LANE)
        val = img_ref[:, pl.ds(start, chunk)] * scale          # (NC, chunk)
        # k = 0 term: max(val, 0) == val for in-range inputs.
        acc0 = bias + coeffs[0] * val
        acc1 = jnp.zeros_like(val)
        # Two partial accumulators break the serial add chain on the 4-wide VALU.
        for k in range(1, cp - 1):
            term = coeffs[k] * jnp.maximum(val, float(k))
            if k % 2 == 0:
                acc0 = acc0 + term
            else:
                acc1 = acc1 + term
        out_ref[:, pl.ds(start, chunk)] = (acc0 + acc1).astype(out_ref.dtype)
        return carry

    lax.fori_loop(0, n_chunks, body, 0)


def _pick_tile_lanes(n_blk, budget_blk):
    """Pick blocks-per-tile d (d | n_blk, d <= budget) and return TILE = d*128.

    Prefer >= 4 and even grid steps (v7x megacore balance + pipelining), then >= 2 steps,
    then the largest tile.  Requiring d | n_blk means no pixel padding beyond 128 lanes.
    """
    divs = [d for d in range(1, n_blk + 1) if n_blk % d == 0 and d <= budget_blk]
    if not divs:
        divs = [1]

    def key(d):
        steps = n_blk // d
        return (not (steps >= 4 and steps % 2 == 0), not (steps >= 2), -d)

    return min(divs, key=key) * _LANE


def color_transform3(org_img, params, color_map_control, *, feature_num,
                     control_point=64, offset_param=0.04):
    """JAX/Pallas equivalent of colorTransform3.forward.

    org_img:            (N, C, H, W) float, values in [0, 1)
    params:             any shape reshapeable to (N, feature_num, control_point)
    color_map_control:  (N, feature_num, control_point)
    """
    N, C, H, W = org_img.shape
    F = feature_num
    CP = control_point
    assert (C * H * W) % F == 0, "C*H*W must be divisible by feature_num"

    # ---- curve -> (bias, second-difference) coefficient table, built once in the wrapper ----
    p = params.reshape(N, F, CP).astype(jnp.float32)
    if offset_param != -1:
        p = p * float(offset_param)
    y = color_map_control.astype(jnp.float32) + p              # (N, F, CP)
    dy = y[..., 1:] - y[..., :-1]                              # (N, F, CP-1) segment slopes
    c = jnp.concatenate([dy[..., :1], dy[..., 1:] - dy[..., :-1]], axis=-1)  # (N, F, CP-1)
    ks = jnp.arange(CP - 1, dtype=jnp.float32)
    bias = y[..., :1] - jnp.sum(c * ks, axis=-1, keepdims=True)               # (N, F, 1)
    tbl = jnp.concatenate([bias, c], axis=-1)                  # (N, F, CP)

    # ---- layout: (image, feature) rows on sublanes, pixels on lanes ----
    NC = N * F
    P = (C * H * W) // F

    # Fold pixel groups into unused sublanes instead of zero-padding rows when NC < 8.
    fold = 1
    if NC < _SUB:
        for r in range(_SUB // NC, 0, -1):
            if P % r == 0:
                fold = r
                break
    NC_eff = NC * fold
    P_eff = P // fold

    NC_pad = ((NC_eff + _SUB - 1) // _SUB) * _SUB
    P_lane = ((P_eff + _LANE - 1) // _LANE) * _LANE
    n_blk = P_lane // _LANE

    # <= ~512 KiB per pixel block: double-buffered in+out blocks stay well under v7x's
    # 64 MiB VMEM and both TCs can run concurrently.
    budget_blk = max(1, (512 * 1024) // (NC_pad * 4 * _LANE))
    TILE = _pick_tile_lanes(n_blk, budget_blk)
    grid = (P_lane // TILE,)

    if TILE % 512 == 0:
        CHUNK = 512
    elif TILE % 256 == 0:
        CHUNK = 256
    else:
        CHUNK = 128

    img_flat = org_img.reshape(NC_eff, P_eff).astype(jnp.float32)
    tbl_flat = tbl.reshape(NC, CP)
    if fold > 1:
        tbl_flat = jnp.repeat(tbl_flat, fold, axis=0)
    if NC_pad != NC_eff:
        img_flat = jnp.pad(img_flat, ((0, NC_pad - NC_eff), (0, 0)))
        tbl_flat = jnp.pad(tbl_flat, ((0, NC_pad - NC_eff), (0, 0)))
    if P_lane != P_eff:
        img_flat = jnp.pad(img_flat, ((0, 0), (0, P_lane - P_eff)))

    kernel = functools.partial(_color_transform_kernel, cp=int(CP), chunk=int(CHUNK))

    out_flat = pl.pallas_call(
        kernel,
        out_shape=jax.ShapeDtypeStruct((NC_pad, P_lane), org_img.dtype),
        grid=grid,
        in_specs=[
            pl.BlockSpec((NC_pad, TILE), lambda pix: (0, pix)),   # pixel tile
            pl.BlockSpec((NC_pad, CP), lambda pix: (0, 0)),       # curve table, resident
        ],
        out_specs=pl.BlockSpec((NC_pad, TILE), lambda pix: (0, pix)),
        compiler_params=pltpu.CompilerParams(
            dimension_semantics=("parallel",),
            vmem_limit_bytes=16 * 1024 * 1024,
        ),
    )(img_flat, tbl_flat)

    out = out_flat[:NC_eff, :P_eff].reshape(N, C, H, W)
    return out


def _reference(org_img, params, color_map_control, *, feature_num,
               control_point=64, offset_param=0.04):
    """Pure-JAX reference mirroring the PyTorch forward (for correctness check)."""
    N, C, H, W = org_img.shape
    F, CP = feature_num, control_point
    p = params.reshape(N, F, CP)
    if offset_param != -1:
        p = p * offset_param
    y = color_map_control + p
    y = jnp.concatenate([y, y[:, :, CP - 1:CP]], axis=2)
    img = org_img.reshape(N, F, -1)
    val = img * (CP - 1)
    idx = jnp.floor(val).astype(jnp.int32)
    coeff = val - idx
    lo = jnp.take_along_axis(y, idx, axis=2)
    hi = jnp.take_along_axis(y, idx + 1, axis=2)
    out = (1.0 - coeff) * lo + coeff * hi
    return out.reshape(N, C, H, W)


if __name__ == "__main__":
    # Small shapes: batch=2, channels(feature_num)=4, spatial=16x16, control_point=64.
    N, C, H, W = 2, 4, 16, 16
    FEATURE_NUM = C
    CP = 64
    OFFSET = 0.04

    key = jax.random.PRNGKey(0)
    k_img, k_par = jax.random.split(key)

    # Image values in [0, 1) so interpolation indices stay in range (matches torch.gather validity).
    org_img = jax.random.uniform(k_img, (N, C, H, W), dtype=jnp.float32,
                                 minval=0.0, maxval=0.999)
    # Deterministic "network output" params (would come from a predictor in the real model).
    params = jax.random.normal(k_par, (N, FEATURE_NUM * CP), dtype=jnp.float32)
    # Identity-like control-point grid: linspace(0, 1, CP) per (image, channel).
    color_map_control = jnp.broadcast_to(
        jnp.linspace(0.0, 1.0, CP, dtype=jnp.float32), (N, FEATURE_NUM, CP))

    # TODO(synk): self.w / nn.Softmax from __init__ are unused by forward(); not implemented.

    out = color_transform3(org_img, params, color_map_control,
                           feature_num=FEATURE_NUM, control_point=CP,
                           offset_param=OFFSET)
    out = jax.block_until_ready(out)

    ref = _reference(org_img, params, color_map_control,
                     feature_num=FEATURE_NUM, control_point=CP,
                     offset_param=OFFSET)

    assert out.shape == (N, C, H, W)
    # The second-difference reformulation reassociates the f32 sum (63 terms with
    # intermediate magnitudes up to ~10), so compare at 1e-4 instead of 1e-5.
    assert jnp.allclose(out, ref, atol=1e-4, rtol=1e-4), "mismatch vs reference"
    print("KERNEL_OK")
</pallas_src>

<mosaic_0001>
module attributes {stable_mosaic.version = 11 : i64} {
  func.func @_color_transform_kernel(%arg0: i32, %arg1: memref<8x128xf32, #tpu.memory_space<vmem>>, %arg2: memref<8x64xf32, #tpu.memory_space<vmem>>, %arg3: memref<8x128xf32, #tpu.memory_space<vmem>>) attributes {dimension_semantics = [#tpu.dimension_semantics<parallel>], iteration_bounds = array<i64: 2>, scalar_prefetch = 0 : i64, scratch_operands = 0 : i64, tpu.core_type = #tpu.core_type<tc>, window_params = [{transform_indices = @transform_0, window_bounds = array<i64: 8, 128>}, {pipeline_mode = #tpu.pipeline_mode<synchronous>, transform_indices = @transform_1, window_bounds = array<i64: 8, 64>}, {transform_indices = @transform_2, window_bounds = array<i64: 8, 128>}]} {
    %c0 = arith.constant 0 : index
    %c0_0 = arith.constant 0 : index
    %0 = vector.load %arg2[%c0, %c0_0] : memref<8x64xf32, #tpu.memory_space<vmem>>, vector<8x1xf32>
    %c0_1 = arith.constant 0 : index
    %c1 = arith.constant 1 : index
    %1 = vector.load %arg2[%c0_1, %c1] : memref<8x64xf32, #tpu.memory_space<vmem>>, vector<8x1xf32>
    %c0_2 = arith.constant 0 : index
    %c2 = arith.constant 2 : index
    %2 = vector.load %arg2[%c0_2, %c2] : memref<8x64xf32, #tpu.memory_space<vmem>>, vector<8x1xf32>
    %c0_3 = arith.constant 0 : index
    %c3 = arith.constant 3 : index
    %3 = vector.load %arg2[%c0_3, %c3] : memref<8x64xf32, #tpu.memory_space<vmem>>, vector<8x1xf32>
    %c0_4 = arith.constant 0 : index
    %c4 = arith.constant 4 : index
    %4 = vector.load %arg2[%c0_4, %c4] : memref<8x64xf32, #tpu.memory_space<vmem>>, vector<8x1xf32>
    %c0_5 = arith.constant 0 : index
    %c5 = arith.constant 5 : index
    %5 = vector.load %arg2[%c0_5, %c5] : memref<8x64xf32, #tpu.memory_space<vmem>>, vector<8x1xf32>
    %c0_6 = arith.constant 0 : index
    %c6 = arith.constant 6 : index
    %6 = vector.load %arg2[%c0_6, %c6] : memref<8x64xf32, #tpu.memory_space<vmem>>, vector<8x1xf32>
    %c0_7 = arith.constant 0 : index
    %c7 = arith.constant 7 : index
    %7 = vector.load %arg2[%c0_7, %c7] : memref<8x64xf32, #tpu.memory_space<vmem>>, vector<8x1xf32>
    %c0_8 = arith.constant 0 : index
    %c8 = arith.constant 8 : index
    %8 = vector.load %arg2[%c0_8, %c8] : memref<8x64xf32, #tpu.memory_space<vmem>>, vector<8x1xf32>
    %c0_9 = arith.constant 0 : index
    %c9 = arith.constant 9 : index
    %9 = vector.load %arg2[%c0_9, %c9] : memref<8x64xf32, #tpu.memory_space<vmem>>, vector<8x1xf32>
    %c0_10 = arith.constant 0 : index
    %c10 = arith.constant 10 : index
    %10 = vector.load %arg2[%c0_10, %c10] : memref<8x64xf32, #tpu.memory_space<vmem>>, vector<8x1xf32>
    %c0_11 = arith.constant 0 : index
    %c11 = arith.constant 11 : index
    %11 = vector.load %arg2[%c0_11, %c11] : memref<8x64xf32, #tpu.memory_space<vmem>>, vector<8x1xf32>
    %c0_12 = arith.constant 0 : index
    %c12 = arith.constant 12 : index
    %12 = vector.load %arg2[%c0_12, %c12] : memref<8x64xf32, #tpu.memory_space<vmem>>, vector<8x1xf32>
    %c0_13 = arith.constant 0 : index
    %c13 = arith.constant 13 : index
    %13 = vector.load %arg2[%c0_13, %c13] : memref<8x64xf32, #tpu.memory_space<vmem>>, vector<8x1xf32>
    %c0_14 = arith.constant 0 : index
    %c14 = arith.constant 14 : index
    %14 = vector.load %arg2[%c0_14, %c14] : memref<8x64xf32, #tpu.memory_space<vmem>>, vector<8x1xf32>
    %c0_15 = arith.constant 0 : index
    %c15 = arith.constant 15 : index
    %15 = vector.load %arg2[%c0_15, %c15] : memref<8x64xf32, #tpu.memory_space<vmem>>, vector<8x1xf32>
    %c0_16 = arith.constant 0 : index
    %c16 = arith.constant 16 : index
    %16 = vector.load %arg2[%c0_16, %c16] : memref<8x64xf32, #tpu.memory_space<vmem>>, vector<8x1xf32>
    %c0_17 = arith.constant 0 : index
    %c17 = arith.constant 17 : index
    %17 = vector.load %arg2[%c0_17, %c17] : memref<8x64xf32, #tpu.memory_space<vmem>>, vector<8x1xf32>
    %c0_18 = arith.constant 0 : index
    %c18 = arith.constant 18 : index
    %18 = vector.load %arg2[%c0_18, %c18] : memref<8x64xf32, #tpu.memory_space<vmem>>, vector<8x1xf32>
    %c0_19 = arith.constant 0 : index
    %c19 = arith.constant 19 : index
    %19 = vector.load %arg2[%c0_19, %c19] : memref<8x64xf32, #tpu.memory_space<vmem>>, vector<8x1xf32>
    %c0_20 = arith.constant 0 : index
    %c20 = arith.constant 20 : index
    %20 = vector.load %arg2[%c0_20, %c20] : memref<8x64xf32, #tpu.memory_space<vmem>>, vector<8x1xf32>
    %c0_21 = arith.constant 0 : index
    %c21 = arith.constant 21 : index
    %21 = vector.load %arg2[%c0_21, %c21] : memref<8x64xf32, #tpu.memory_space<vmem>>, vector<8x1xf32>
    %c0_22 = arith.constant 0 : index
    %c22 = arith.constant 22 : index
    %22 = vector.load %arg2[%c0_22, %c22] : memref<8x64xf32, #tpu.memory_space<vmem>>, vector<8x1xf32>
    %c0_23 = arith.constant 0 : index
    %c23 = arith.constant 23 : index
    %23 = vector.load %arg2[%c0_23, %c23] : memref<8x64xf32, #tpu.memory_space<vmem>>, vector<8x1xf32>
    %c0_24 = arith.constant 0 : index
    %c24 = arith.constant 24 : index
    %24 = vector.load %arg2[%c0_24, %c24] : memref<8x64xf32, #tpu.memory_space<vmem>>, vector<8x1xf32>
    %c0_25 = arith.constant 0 : index
    %c25 = arith.constant 25 : index
    %25 = vector.load %arg2[%c0_25, %c25] : memref<8x64xf32, #tpu.memory_space<vmem>>, vector<8x1xf32>
    %c0_26 = arith.constant 0 : index
    %c26 = arith.constant 26 : index
    %26 = vector.load %arg2[%c0_26, %c26] : memref<8x64xf32, #tpu.memory_space<vmem>>, vector<8x1xf32>
    %c0_27 = arith.constant 0 : index
    %c27 = arith.constant 27 : index
    %27 = vector.load %arg2[%c0_27, %c27] : memref<8x64xf32, #tpu.memory_space<vmem>>, vector<8x1xf32>
    %c0_28 = arith.constant 0 : index
    %c28 = arith.constant 28 : index
    %28 = vector.load %arg2[%c0_28, %c28] : memref<8x64xf32, #tpu.memory_space<vmem>>, vector<8x1xf32>
    %c0_29 = arith.constant 0 : index
    %c29 = arith.constant 29 : index
    %29 = vector.load %arg2[%c0_29, %c29] : memref<8x64xf32, #tpu.memory_space<vmem>>, vector<8x1xf32>
    %c0_30 = arith.constant 0 : index
    %c30 = arith.constant 30 : index
    %30 = vector.load %arg2[%c0_30, %c30] : memref<8x64xf32, #tpu.memory_space<vmem>>, vector<8x1xf32>
    %c0_31 = arith.constant 0 : index
    %c31 = arith.constant 31 : index
    %31 = vector.load %arg2[%c0_31, %c31] : memref<8x64xf32, #tpu.memory_space<vmem>>, vector<8x1xf32>
    %c0_32 = arith.constant 0 : index
    %c32 = arith.constant 32 : index
    %32 = vector.load %arg2[%c0_32, %c32] : memref<8x64xf32, #tpu.memory_space<vmem>>, vector<8x1xf32>
    %c0_33 = arith.constant 0 : index
    %c33 = arith.constant 33 : index
    %33 = vector.load %arg2[%c0_33, %c33] : memref<8x64xf32, #tpu.memory_space<vmem>>, vector<8x1xf32>
    %c0_34 = arith.constant 0 : index
    %c34 = arith.constant 34 : index
    %34 = vector.load %arg2[%c0_34, %c34] : memref<8x64xf32, #tpu.memory_space<vmem>>, vector<8x1xf32>
    %c0_35 = arith.constant 0 : index
    %c35 = arith.constant 35 : index
    %35 = vector.load %arg2[%c0_35, %c35] : memref<8x64xf32, #tpu.memory_space<vmem>>, vector<8x1xf32>
    %c0_36 = arith.constant 0 : index
    %c36 = arith.constant 36 : index
    %36 = vector.load %arg2[%c0_36, %c36] : memref<8x64xf32, #tpu.memory_space<vmem>>, vector<8x1xf32>
    %c0_37 = arith.constant 0 : index
    %c37 = arith.constant 37 : index
    %37 = vector.load %arg2[%c0_37, %c37] : memref<8x64xf32, #tpu.memory_space<vmem>>, vector<8x1xf32>
    %c0_38 = arith.constant 0 : index
    %c38 = arith.constant 38 : index
    %38 = vector.load %arg2[%c0_38, %c38] : memref<8x64xf32, #tpu.memory_space<vmem>>, vector<8x1xf32>
    %c0_39 = arith.constant 0 : index
    %c39 = arith.constant 39 : index
    %39 = vector.load %arg2[%c0_39, %c39] : memref<8x64xf32, #tpu.memory_space<vmem>>, vector<8x1xf32>
    %c0_40 = arith.constant 0 : index
    %c40 = arith.constant 40 : index
    %40 = vector.load %arg2[%c0_40, %c40] : memref<8x64xf32, #tpu.memory_space<vmem>>, vector<8x1xf32>
    %c0_41 = arith.constant 0 : index
    %c41 = arith.constant 41 : index
    %41 = vector.load %arg2[%c0_41, %c41] : memref<8x64xf32, #tpu.memory_space<vmem>>, vector<8x1xf32>
    %c0_42 = arith.constant 0 : index
    %c42 = arith.constant 42 : index
    %42 = vector.load %arg2[%c0_42, %c42] : memref<8x64xf32, #tpu.memory_space<vmem>>, vector<8x1xf32>
    %c0_43 = arith.constant 0 : index
    %c43 = arith.constant 43 : index
    %43 = vector.load %arg2[%c0_43, %c43] : memref<8x64xf32, #tpu.memory_space<vmem>>, vector<8x1xf32>
    %c0_44 = arith.constant 0 : index
    %c44 = arith.constant 44 : index
    %44 = vector.load %arg2[%c0_44, %c44] : memref<8x64xf32, #tpu.memory_space<vmem>>, vector<8x1xf32>
    %c0_45 = arith.constant 0 : index
    %c45 = arith.constant 45 : index
    %45 = vector.load %arg2[%c0_45, %c45] : memref<8x64xf32, #tpu.memory_space<vmem>>, vector<8x1xf32>
    %c0_46 = arith.constant 0 : index
    %c46 = arith.constant 46 : index
    %46 = vector.load %arg2[%c0_46, %c46] : memref<8x64xf32, #tpu.memory_space<vmem>>, vector<8x1xf32>
    %c0_47 = arith.constant 0 : index
    %c47 = arith.constant 47 : index
    %47 = vector.load %arg2[%c0_47, %c47] : memref<8x64xf32, #tpu.memory_space<vmem>>, vector<8x1xf32>
    %c0_48 = arith.constant 0 : index
    %c48 = arith.constant 48 : index
    %48 = vector.load %arg2[%c0_48, %c48] : memref<8x64xf32, #tpu.memory_space<vmem>>, vector<8x1xf32>
    %c0_49 = arith.constant 0 : index
    %c49 = arith.constant 49 : index
    %49 = vector.load %arg2[%c0_49, %c49] : memref<8x64xf32, #tpu.memory_space<vmem>>, vector<8x1xf32>
    %c0_50 = arith.constant 0 : index
    %c50 = arith.constant 50 : index
    %50 = vector.load %arg2[%c0_50, %c50] : memref<8x64xf32, #tpu.memory_space<vmem>>, vector<8x1xf32>
    %c0_51 = arith.constant 0 : index
    %c51 = arith.constant 51 : index
    %51 = vector.load %arg2[%c0_51, %c51] : memref<8x64xf32, #tpu.memory_space<vmem>>, vector<8x1xf32>
    %c0_52 = arith.constant 0 : index
    %c52 = arith.constant 52 : index
    %52 = vector.load %arg2[%c0_52, %c52] : memref<8x64xf32, #tpu.memory_space<vmem>>, vector<8x1xf32>
    %c0_53 = arith.constant 0 : index
    %c53 = arith.constant 53 : index
    %53 = vector.load %arg2[%c0_53, %c53] : memref<8x64xf32, #tpu.memory_space<vmem>>, vector<8x1xf32>
    %c0_54 = arith.constant 0 : index
    %c54 = arith.constant 54 : index
    %54 = vector.load %arg2[%c0_54, %c54] : memref<8x64xf32, #tpu.memory_space<vmem>>, vector<8x1xf32>
    %c0_55 = arith.constant 0 : index
    %c55 = arith.constant 55 : index
    %55 = vector.load %arg2[%c0_55, %c55] : memref<8x64xf32, #tpu.memory_space<vmem>>, vector<8x1xf32>
    %c0_56 = arith.constant 0 : index
    %c56 = arith.constant 56 : index
    %56 = vector.load %arg2[%c0_56, %c56] : memref<8x64xf32, #tpu.memory_space<vmem>>, vector<8x1xf32>
    %c0_57 = arith.constant 0 : index
    %c57 = arith.constant 57 : index
    %57 = vector.load %arg2[%c0_57, %c57] : memref<8x64xf32, #tpu.memory_space<vmem>>, vector<8x1xf32>
    %c0_58 = arith.constant 0 : index
    %c58 = arith.constant 58 : index
    %58 = vector.load %arg2[%c0_58, %c58] : memref<8x64xf32, #tpu.memory_space<vmem>>, vector<8x1xf32>
    %c0_59 = arith.constant 0 : index
    %c59 = arith.constant 59 : index
    %59 = vector.load %arg2[%c0_59, %c59] : memref<8x64xf32, #tpu.memory_space<vmem>>, vector<8x1xf32>
    %c0_60 = arith.constant 0 : index
    %c60 = arith.constant 60 : index
    %60 = vector.load %arg2[%c0_60, %c60] : memref<8x64xf32, #tpu.memory_space<vmem>>, vector<8x1xf32>
    %c0_61 = arith.constant 0 : index
    %c61 = arith.constant 61 : index
    %61 = vector.load %arg2[%c0_61, %c61] : memref<8x64xf32, #tpu.memory_space<vmem>>, vector<8x1xf32>
    %c0_62 = arith.constant 0 : index
    %c62 = arith.constant 62 : index
    %62 = vector.load %arg2[%c0_62, %c62] : memref<8x64xf32, #tpu.memory_space<vmem>>, vector<8x1xf32>
    %c0_63 = arith.constant 0 : index
    %c63 = arith.constant 63 : index
    %63 = vector.load %arg2[%c0_63, %c63] : memref<8x64xf32, #tpu.memory_space<vmem>>, vector<8x1xf32>
    %c0_i32 = arith.constant 0 : i32
    %c128_i32 = arith.constant 128 : i32
    %64 = arith.muli %c0_i32, %c128_i32 : i32
    %65 = tpu.assume_multiple %64, 128 : i32
    %c0_64 = arith.constant 0 : index
    %66 = arith.index_cast %65 : i32 to index
    %67 = vector.load %arg1[%c0_64, %66] : memref<8x128xf32, #tpu.memory_space<vmem>>, vector<8x128xf32>
    %cst = arith.constant 6.300000e+01 : f32
    %68 = vector.broadcast %cst : f32 to vector<8x128xf32>
    %69 = arith.mulf %67, %68 : vector<8x128xf32>
    %70 = vector.broadcast %1 : vector<8x1xf32> to vector<8x128xf32>
    %71 = arith.mulf %70, %69 : vector<8x128xf32>
    %72 = vector.broadcast %0 : vector<8x1xf32> to vector<8x128xf32>
    %73 = arith.addf %72, %71 : vector<8x128xf32>
    %cst_65 = arith.constant 0.000000e+00 : f32
    %74 = vector.broadcast %cst_65 : f32 to vector<8x128xf32>
    %cst_66 = arith.constant 1.000000e+00 : f32
    %75 = vector.broadcast %cst_66 : f32 to vector<8x128xf32>
    %76 = arith.maximumf %69, %75 : vector<8x128xf32>
    %77 = vector.broadcast %2 : vector<8x1xf32> to vector<8x128xf32>
    %78 = arith.mulf %77, %76 : vector<8x128xf32>
    %79 = arith.addf %74, %78 : vector<8x128xf32>
    %cst_67 = arith.constant 2.000000e+00 : f32
    %80 = vector.broadcast %cst_67 : f32 to vector<8x128xf32>
    %81 = arith.maximumf %69, %80 : vector<8x128xf32>
    %82 = vector.broadcast %3 : vector<8x1xf32> to vector<8x128xf32>
    %83 = arith.mulf %82, %81 : vector<8x128xf32>
    %84 = arith.addf %73, %83 : vector<8x128xf32>
    %cst_68 = arith.constant 3.000000e+00 : f32
    %85 = vector.broadcast %cst_68 : f32 to vector<8x128xf32>
    %86 = arith.maximumf %69, %85 : vector<8x128xf32>
    %87 = vector.broadcast %4 : vector<8x1xf32> to vector<8x128xf32>
    %88 = arith.mulf %87, %86 : vector<8x128xf32>
    %89 = arith.addf %79, %88 : vector<8x128xf32>
    %cst_69 = arith.constant 4.000000e+00 : f32
    %90 = vector.broadcast %cst_69 : f32 to vector<8x128xf32>
    %91 = arith.maximumf %69, %90 : vector<8x128xf32>
    %92 = vector.broadcast %5 : vector<8x1xf32> to vector<8x128xf32>
    %93 = arith.mulf %92, %91 : vector<8x128xf32>
    %94 = arith.addf %84, %93 : vector<8x128xf32>
    %cst_70 = arith.constant 5.000000e+00 : f32
    %95 = vector.broadcast %cst_70 : f32 to vector<8x128xf32>
    %96 = arith.maximumf %69, %95 : vector<8x128xf32>
    %97 = vector.broadcast %6 : vector<8x1xf32> to vector<8x128xf32>
    %98 = arith.mulf %97, %96 : vector<8x128xf32>
    %99 = arith.addf %89, %98 : vector<8x128xf32>
    %cst_71 = arith.constant 6.000000e+00 : f32
    %100 = vector.broadcast %cst_71 : f32 to vector<8x128xf32>
    %101 = arith.maximumf %69, %100 : vector<8x128xf32>
    %102 = vector.broadcast %7 : vector<8x1xf32> to vector<8x128xf32>
    %103 = arith.mulf %102, %101 : vector<8x128xf32>
    %104 = arith.addf %94, %103 : vector<8x128xf32>
    %cst_72 = arith.constant 7.000000e+00 : f32
    %105 = vector.broadcast %cst_72 : f32 to vector<8x128xf32>
    %106 = arith.maximumf %69, %105 : vector<8x128xf32>
    %107 = vector.broadcast %8 : vector<8x1xf32> to vector<8x128xf32>
    %108 = arith.mulf %107, %106 : vector<8x128xf32>
    %109 = arith.addf %99, %108 : vector<8x128xf32>
    %cst_73 = arith.constant 8.000000e+00 : f32
    %110 = vector.broadcast %cst_73 : f32 to vector<8x128xf32>
    %111 = arith.maximumf %69, %110 : vector<8x128xf32>
    %112 = vector.broadcast %9 : vector<8x1xf32> to vector<8x128xf32>
    %113 = arith.mulf %112, %111 : vector<8x128xf32>
    %114 = arith.addf %104, %113 : vector<8x128xf32>
    %cst_74 = arith.constant 9.000000e+00 : f32
    %115 = vector.broadcast %cst_74 : f32 to vector<8x128xf32>
    %116 = arith.maximumf %69, %115 : vector<8x128xf32>
    %117 = vector.broadcast %10 : vector<8x1xf32> to vector<8x128xf32>
    %118 = arith.mulf %117, %116 : vector<8x128xf32>
    %119 = arith.addf %109, %118 : vector<8x128xf32>
    %cst_75 = arith.constant 1.000000e+01 : f32
    %120 = vector.broadcast %cst_75 : f32 to vector<8x128xf32>
    %121 = arith.maximumf %69, %120 : vector<8x128xf32>
    %122 = vector.broadcast %11 : vector<8x1xf32> to vector<8x128xf32>
    %123 = arith.mulf %122, %121 : vector<8x128xf32>
    %124 = arith.addf %114, %123 : vector<8x128xf32>
    %cst_76 = arith.constant 1.100000e+01 : f32
    %125 = vector.broadcast %cst_76 : f32 to vector<8x128xf32>
    %126 = arith.maximumf %69, %125 : vector<8x128xf32>
    %127 = vector.broadcast %12 : vector<8x1xf32> to vector<8x128xf32>
    %128 = arith.mulf %127, %126 : vector<8x128xf32>
    %129 = arith.addf %119, %128 : vector<8x128xf32>
    %cst_77 = arith.constant 1.200000e+01 : f32
    %130 = vector.broadcast %cst_77 : f32 to vector<8x128xf32>
    %131 = arith.maximumf %69, %130 : vector<8x128xf32>
    %132 = vector.broadcast %13 : vector<8x1xf32> to vector<8x128xf32>
    %133 = arith.mulf %132, %131 : vector<8x128xf32>
    %134 = arith.addf %124, %133 : vector<8x128xf32>
    %cst_78 = arith.constant 1.300000e+01 : f32
    %135 = vector.broadcast %cst_78 : f32 to vector<8x128xf32>
    %136 = arith.maximumf %69, %135 : vector<8x128xf32>
    %137 = vector.broadcast %14 : vector<8x1xf32> to vector<8x128xf32>
    %138 = arith.mulf %137, %136 : vector<8x128xf32>
    %139 = arith.addf %129, %138 : vector<8x128xf32>
    %cst_79 = arith.constant 1.400000e+01 : f32
    %140 = vector.broadcast %cst_79 : f32 to vector<8x128xf32>
    %141 = arith.maximumf %69, %140 : vector<8x128xf32>
    %142 = vector.broadcast %15 : vector<8x1xf32> to vector<8x128xf32>
    %143 = arith.mulf %142, %141 : vector<8x128xf32>
    %144 = arith.addf %134, %143 : vector<8x128xf32>
    %cst_80 = arith.constant 1.500000e+01 : f32
    %145 = vector.broadcast %cst_80 : f32 to vector<8x128xf32>
    %146 = arith.maximumf %69, %145 : vector<8x128xf32>
    %147 = vector.broadcast %16 : vector<8x1xf32> to vector<8x128xf32>
    %148 = arith.mulf %147, %146 : vector<8x128xf32>
    %149 = arith.addf %139, %148 : vector<8x128xf32>
    %cst_81 = arith.constant 1.600000e+01 : f32
    %150 = vector.broadcast %cst_81 : f32 to vector<8x128xf32>
    %151 = arith.maximumf %69, %150 : vector<8x128xf32>
    %152 = vector.broadcast %17 : vector<8x1xf32> to vector<8x128xf32>
    %153 = arith.mulf %152, %151 : vector<8x128xf32>
    %154 = arith.addf %144, %153 : vector<8x128xf32>
    %cst_82 = arith.constant 1.700000e+01 : f32
    %155 = vector.broadcast %cst_82 : f32 to vector<8x128xf32>
    %156 = arith.maximumf %69, %155 : vector<8x128xf32>
    %157 = vector.broadcast %18 : vector<8x1xf32> to vector<8x128xf32>
    %158 = arith.mulf %157, %156 : vector<8x128xf32>
    %159 = arith.addf %149, %158 : vector<8x128xf32>
    %cst_83 = arith.constant 1.800000e+01 : f32
    %160 = vector.broadcast %cst_83 : f32 to vector<8x128xf32>
    %161 = arith.maximumf %69, %160 : vector<8x128xf32>
    %162 = vector.broadcast %19 : vector<8x1xf32> to vector<8x128xf32>
    %163 = arith.mulf %162, %161 : vector<8x128xf32>
    %164 = arith.addf %154, %163 : vector<8x128xf32>
    %cst_84 = arith.constant 1.900000e+01 : f32
    %165 = vector.broadcast %cst_84 : f32 to vector<8x128xf32>
    %166 = arith.maximumf %69, %165 : vector<8x128xf32>
    %167 = vector.broadcast %20 : vector<8x1xf32> to vector<8x128xf32>
    %168 = arith.mulf %167, %166 : vector<8x128xf32>
    %169 = arith.addf %159, %168 : vector<8x128xf32>
    %cst_85 = arith.constant 2.000000e+01 : f32
    %170 = vector.broadcast %cst_85 : f32 to vector<8x128xf32>
    %171 = arith.maximumf %69, %170 : vector<8x128xf32>
    %172 = vector.broadcast %21 : vector<8x1xf32> to vector<8x128xf32>
    %173 = arith.mulf %172, %171 : vector<8x128xf32>
    %174 = arith.addf %164, %173 : vector<8x128xf32>
    %cst_86 = arith.constant 2.100000e+01 : f32
    %175 = vector.broadcast %cst_86 : f32 to vector<8x128xf32>
    %176 = arith.maximumf %69, %175 : vector<8x128xf32>
    %177 = vector.broadcast %22 : vector<8x1xf32> to vector<8x128xf32>
    %178 = arith.mulf %177, %176 : vector<8x128xf32>
    %179 = arith.addf %169, %178 : vector<8x128xf32>
    %cst_87 = arith.constant 2.200000e+01 : f32
    %180 = vector.broadcast %cst_87 : f32 to vector<8x128xf32>
    %181 = arith.maximumf %69, %180 : vector<8x128xf32>
    %182 = vector.broadcast %23 : vector<8x1xf32> to vector<8x128xf32>
    %183 = arith.mulf %182, %181 : vector<8x128xf32>
    %184 = arith.addf %174, %183 : vector<8x128xf32>
    %cst_88 = arith.constant 2.300000e+01 : f32
    %185 = vector.broadcast %cst_88 : f32 to vector<8x128xf32>
    %186 = arith.maximumf %69, %185 : vector<8x128xf32>
    %187 = vector.broadcast %24 : vector<8x1xf32> to vector<8x128xf32>
    %188 = arith.mulf %187, %186 : vector<8x128xf32>
    %189 = arith.addf %179, %188 : vector<8x128xf32>
    %cst_89 = arith.constant 2.400000e+01 : f32
    %190 = vector.broadcast %cst_89 : f32 to vector<8x128xf32>
    %191 = arith.maximumf %69, %190 : vector<8x128xf32>
    %192 = vector.broadcast %25 : vector<8x1xf32> to vector<8x128xf32>
    %193 = arith.mulf %192, %191 : vector<8x128xf32>
    %194 = arith.addf %184, %193 : vector<8x128xf32>
    %cst_90 = arith.constant 2.500000e+01 : f32
    %195 = vector.broadcast %cst_90 : f32 to vector<8x128xf32>
    %196 = arith.maximumf %69, %195 : vector<8x128xf32>
    %197 = vector.broadcast %26 : vector<8x1xf32> to vector<8x128xf32>
    %198 = arith.mulf %197, %196 : vector<8x128xf32>
    %199 = arith.addf %189, %198 : vector<8x128xf32>
    %cst_91 = arith.constant 2.600000e+01 : f32
    %200 = vector.broadcast %cst_91 : f32 to vector<8x128xf32>
    %201 = arith.maximumf %69, %200 : vector<8x128xf32>
    %202 = vector.broadcast %27 : vector<8x1xf32> to vector<8x128xf32>
    %203 = arith.mulf %202, %201 : vector<8x128xf32>
    %204 = arith.addf %194, %203 : vector<8x128xf32>
    %cst_92 = arith.constant 2.700000e+01 : f32
    %205 = vector.broadcast %cst_92 : f32 to vector<8x128xf32>
    %206 = arith.maximumf %69, %205 : vector<8x128xf32>
    %207 = vector.broadcast %28 : vector<8x1xf32> to vector<8x128xf32>
    %208 = arith.mulf %207, %206 : vector<8x128xf32>
    %209 = arith.addf %199, %208 : vector<8x128xf32>
    %cst_93 = arith.constant 2.800000e+01 : f32
    %210 = vector.broadcast %cst_93 : f32 to vector<8x128xf32>
    %211 = arith.maximumf %69, %210 : vector<8x128xf32>
    %212 = vector.broadcast %29 : vector<8x1xf32> to vector<8x128xf32>
    %213 = arith.mulf %212, %211 : vector<8x128xf32>
    %214 = arith.addf %204, %213 : vector<8x128xf32>
    %cst_94 = arith.constant 2.900000e+01 : f32
    %215 = vector.broadcast %cst_94 : f32 to vector<8x128xf32>
    %216 = arith.maximumf %69, %215 : vector<8x128xf32>
    %217 = vector.broadcast %30 : vector<8x1xf32> to vector<8x128xf32>
    %218 = arith.mulf %217, %216 : vector<8x128xf32>
    %219 = arith.addf %209, %218 : vector<8x128xf32>
    %cst_95 = arith.constant 3.000000e+01 : f32
    %220 = vector.broadcast %cst_95 : f32 to vector<8x128xf32>
    %221 = arith.maximumf %69, %220 : vector<8x128xf32>
    %222 = vector.broadcast %31 : vector<8x1xf32> to vector<8x128xf32>
    %223 = arith.mulf %222, %221 : vector<8x128xf32>
    %224 = arith.addf %214, %223 : vector<8x128xf32>
    %cst_96 = arith.constant 3.100000e+01 : f32
    %225 = vector.broadcast %cst_96 : f32 to vector<8x128xf32>
    %226 = arith.maximumf %69, %225 : vector<8x128xf32>
    %227 = vector.broadcast %32 : vector<8x1xf32> to vector<8x128xf32>
    %228 = arith.mulf %227, %226 : vector<8x128xf32>
    %229 = arith.addf %219, %228 : vector<8x128xf32>
    %cst_97 = arith.constant 3.200000e+01 : f32
    %230 = vector.broadcast %cst_97 : f32 to vector<8x128xf32>
    %231 = arith.maximumf %69, %230 : vector<8x128xf32>
    %232 = vector.broadcast %33 : vector<8x1xf32> to vector<8x128xf32>
    %233 = arith.mulf %232, %231 : vector<8x128xf32>
    %234 = arith.addf %224, %233 : vector<8x128xf32>
    %cst_98 = arith.constant 3.300000e+01 : f32
    %235 = vector.broadcast %cst_98 : f32 to vector<8x128xf32>
    %236 = arith.maximumf %69, %235 : vector<8x128xf32>
    %237 = vector.broadcast %34 : vector<8x1xf32> to vector<8x128xf32>
    %238 = arith.mulf %237, %236 : vector<8x128xf32>
    %239 = arith.addf %229, %238 : vector<8x128xf32>
    %cst_99 = arith.constant 3.400000e+01 : f32
    %240 = vector.broadcast %cst_99 : f32 to vector<8x128xf32>
    %241 = arith.maximumf %69, %240 : vector<8x128xf32>
    %242 = vector.broadcast %35 : vector<8x1xf32> to vector<8x128xf32>
    %243 = arith.mulf %242, %241 : vector<8x128xf32>
    %244 = arith.addf %234, %243 : vector<8x128xf32>
    %cst_100 = arith.constant 3.500000e+01 : f32
    %245 = vector.broadcast %cst_100 : f32 to vector<8x128xf32>
    %246 = arith.maximumf %69, %245 : vector<8x128xf32>
    %247 = vector.broadcast %36 : vector<8x1xf32> to vector<8x128xf32>
    %248 = arith.mulf %247, %246 : vector<8x128xf32>
    %249 = arith.addf %239, %248 : vector<8x128xf32>
    %cst_101 = arith.constant 3.600000e+01 : f32
    %250 = vector.broadcast %cst_101 : f32 to vector<8x128xf32>
    %251 = arith.maximumf %69, %250 : vector<8x128xf32>
    %252 = vector.broadcast %37 : vector<8x1xf32> to vector<8x128xf32>
    %253 = arith.mulf %252, %251 : vector<8x128xf32>
    %254 = arith.addf %244, %253 : vector<8x128xf32>
    %cst_102 = arith.constant 3.700000e+01 : f32
    %255 = vector.broadcast %cst_102 : f32 to vector<8x128xf32>
    %256 = arith.maximumf %69, %255 : vector<8x128xf32>
    %257 = vector.broadcast %38 : vector<8x1xf32> to vector<8x128xf32>
    %258 = arith.mulf %257, %256 : vector<8x128xf32>
    %259 = arith.addf %249, %258 : vector<8x128xf32>
    %cst_103 = arith.constant 3.800000e+01 : f32
    %260 = vector.broadcast %cst_103 : f32 to vector<8x128xf32>
    %261 = arith.maximumf %69, %260 : vector<8x128xf32>
    %262 = vector.broadcast %39 : vector<8x1xf32> to vector<8x128xf32>
    %263 = arith.mulf %262, %261 : vector<8x128xf32>
    %264 = arith.addf %254, %263 : vector<8x128xf32>
    %cst_104 = arith.constant 3.900000e+01 : f32
    %265 = vector.broadcast %cst_104 : f32 to vector<8x128xf32>
    %266 = arith.maximumf %69, %265 : vector<8x128xf32>
    %267 = vector.broadcast %40 : vector<8x1xf32> to vector<8x128xf32>
    %268 = arith.mulf %267, %266 : vector<8x128xf32>
    %269 = arith.addf %259, %268 : vector<8x128xf32>
    %cst_105 = arith.constant 4.000000e+01 : f32
    %270 = vector.broadcast %cst_105 : f32 to vector<8x128xf32>
    %271 = arith.maximumf %69, %270 : vector<8x128xf32>
    %272 = vector.broadcast %41 : vector<8x1xf32> to vector<8x128xf32>
    %273 = arith.mulf %272, %271 : vector<8x128xf32>
    %274 = arith.addf %264, %273 : vector<8x128xf32>
    %cst_106 = arith.constant 4.100000e+01 : f32
    %275 = vector.broadcast %cst_106 : f32 to vector<8x128xf32>
    %276 = arith.maximumf %69, %275 : vector<8x128xf32>
    %277 = vector.broadcast %42 : vector<8x1xf32> to vector<8x128xf32>
    %278 = arith.mulf %277, %276 : vector<8x128xf32>
    %279 = arith.addf %269, %278 : vector<8x128xf32>
    %cst_107 = arith.constant 4.200000e+01 : f32
    %280 = vector.broadcast %cst_107 : f32 to vector<8x128xf32>
    %281 = arith.maximumf %69, %280 : vector<8x128xf32>
    %282 = vector.broadcast %43 : vector<8x1xf32> to vector<8x128xf32>
    %283 = arith.mulf %282, %281 : vector<8x128xf32>
    %284 = arith.addf %274, %283 : vector<8x128xf32>
    %cst_108 = arith.constant 4.300000e+01 : f32
    %285 = vector.broadcast %cst_108 : f32 to vector<8x128xf32>
    %286 = arith.maximumf %69, %285 : vector<8x128xf32>
    %287 = vector.broadcast %44 : vector<8x1xf32> to vector<8x128xf32>
    %288 = arith.mulf %287, %286 : vector<8x128xf32>
    %289 = arith.addf %279, %288 : vector<8x128xf32>
    %cst_109 = arith.constant 4.400000e+01 : f32
    %290 = vector.broadcast %cst_109 : f32 to vector<8x128xf32>
    %291 = arith.maximumf %69, %290 : vector<8x128xf32>
    %292 = vector.broadcast %45 : vector<8x1xf32> to vector<8x128xf32>
    %293 = arith.mulf %292, %291 : vector<8x128xf32>
    %294 = arith.addf %284, %293 : vector<8x128xf32>
    %cst_110 = arith.constant 4.500000e+01 : f32
    %295 = vector.broadcast %cst_110 : f32 to vector<8x128xf32>
    %296 = arith.maximumf %69, %295 : vector<8x128xf32>
    %297 = vector.broadcast %46 : vector<8x1xf32> to vector<8x128xf32>
    %298 = arith.mulf %297, %296 : vector<8x128xf32>
    %299 = arith.addf %289, %298 : vector<8x128xf32>
    %cst_111 = arith.constant 4.600000e+01 : f32
    %300 = vector.broadcast %cst_111 : f32 to vector<8x128xf32>
    %301 = arith.maximumf %69, %300 : vector<8x128xf32>
    %302 = vector.broadcast %47 : vector<8x1xf32> to vector<8x128xf32>
    %303 = arith.mulf %302, %301 : vector<8x128xf32>
    %304 = arith.addf %294, %303 : vector<8x128xf32>
    %cst_112 = arith.constant 4.700000e+01 : f32
    %305 = vector.broadcast %cst_112 : f32 to vector<8x128xf32>
    %306 = arith.maximumf %69, %305 : vector<8x128xf32>
    %307 = vector.broadcast %48 : vector<8x1xf32> to vector<8x128xf32>
    %308 = arith.mulf %307, %306 : vector<8x128xf32>
    %309 = arith.addf %299, %308 : vector<8x128xf32>
    %cst_113 = arith.constant 4.800000e+01 : f32
    %310 = vector.broadcast %cst_113 : f32 to vector<8x128xf32>
    %311 = arith.maximumf %69, %310 : vector<8x128xf32>
    %312 = vector.broadcast %49 : vector<8x1xf32> to vector<8x128xf32>
    %313 = arith.mulf %312, %311 : vector<8x128xf32>
    %314 = arith.addf %304, %313 : vector<8x128xf32>
    %cst_114 = arith.constant 4.900000e+01 : f32
    %315 = vector.broadcast %cst_114 : f32 to vector<8x128xf32>
    %316 = arith.maximumf %69, %315 : vector<8x128xf32>
    %317 = vector.broadcast %50 : vector<8x1xf32> to vector<8x128xf32>
    %318 = arith.mulf %317, %316 : vector<8x128xf32>
    %319 = arith.addf %309, %318 : vector<8x128xf32>
    %cst_115 = arith.constant 5.000000e+01 : f32
    %320 = vector.broadcast %cst_115 : f32 to vector<8x128xf32>
    %321 = arith.maximumf %69, %320 : vector<8x128xf32>
    %322 = vector.broadcast %51 : vector<8x1xf32> to vector<8x128xf32>
    %323 = arith.mulf %322, %321 : vector<8x128xf32>
    %324 = arith.addf %314, %323 : vector<8x128xf32>
    %cst_116 = arith.constant 5.100000e+01 : f32
    %325 = vector.broadcast %cst_116 : f32 to vector<8x128xf32>
    %326 = arith.maximumf %69, %325 : vector<8x128xf32>
    %327 = vector.broadcast %52 : vector<8x1xf32> to vector<8x128xf32>
    %328 = arith.mulf %327, %326 : vector<8x128xf32>
    %329 = arith.addf %319, %328 : vector<8x128xf32>
    %cst_117 = arith.constant 5.200000e+01 : f32
    %330 = vector.broadcast %cst_117 : f32 to vector<8x128xf32>
    %331 = arith.maximumf %69, %330 : vector<8x128xf32>
    %332 = vector.broadcast %53 : vector<8x1xf32> to vector<8x128xf32>
    %333 = arith.mulf %332, %331 : vector<8x128xf32>
    %334 = arith.addf %324, %333 : vector<8x128xf32>
    %cst_118 = arith.constant 5.300000e+01 : f32
    %335 = vector.broadcast %cst_118 : f32 to vector<8x128xf32>
    %336 = arith.maximumf %69, %335 : vector<8x128xf32>
    %337 = vector.broadcast %54 : vector<8x1xf32> to vector<8x128xf32>
    %338 = arith.mulf %337, %336 : vector<8x128xf32>
    %339 = arith.addf %329, %338 : vector<8x128xf32>
    %cst_119 = arith.constant 5.400000e+01 : f32
    %340 = vector.broadcast %cst_119 : f32 to vector<8x128xf32>
    %341 = arith.maximumf %69, %340 : vector<8x128xf32>
    %342 = vector.broadcast %55 : vector<8x1xf32> to vector<8x128xf32>
    %343 = arith.mulf %342, %341 : vector<8x128xf32>
    %344 = arith.addf %334, %343 : vector<8x128xf32>
    %cst_120 = arith.constant 5.500000e+01 : f32
    %345 = vector.broadcast %cst_120 : f32 to vector<8x128xf32>
    %346 = arith.maximumf %69, %345 : vector<8x128xf32>
    %347 = vector.broadcast %56 : vector<8x1xf32> to vector<8x128xf32>
    %348 = arith.mulf %347, %346 : vector<8x128xf32>
    %349 = arith.addf %339, %348 : vector<8x128xf32>
    %cst_121 = arith.constant 5.600000e+01 : f32
    %350 = vector.broadcast %cst_121 : f32 to vector<8x128xf32>
    %351 = arith.maximumf %69, %350 : vector<8x128xf32>
    %352 = vector.broadcast %57 : vector<8x1xf32> to vector<8x128xf32>
    %353 = arith.mulf %352, %351 : vector<8x128xf32>
    %354 = arith.addf %344, %353 : vector<8x128xf32>
    %cst_122 = arith.constant 5.700000e+01 : f32
    %355 = vector.broadcast %cst_122 : f32 to vector<8x128xf32>
    %356 = arith.maximumf %69, %355 : vector<8x128xf32>
    %357 = vector.broadcast %58 : vector<8x1xf32> to vector<8x128xf32>
    %358 = arith.mulf %357, %356 : vector<8x128xf32>
    %359 = arith.addf %349, %358 : vector<8x128xf32>
    %cst_123 = arith.constant 5.800000e+01 : f32
    %360 = vector.broadcast %cst_123 : f32 to vector<8x128xf32>
    %361 = arith.maximumf %69, %360 : vector<8x128xf32>
    %362 = vector.broadcast %59 : vector<8x1xf32> to vector<8x128xf32>
    %363 = arith.mulf %362, %361 : vector<8x128xf32>
    %364 = arith.addf %354, %363 : vector<8x128xf32>
    %cst_124 = arith.constant 5.900000e+01 : f32
    %365 = vector.broadcast %cst_124 : f32 to vector<8x128xf32>
    %366 = arith.maximumf %69, %365 : vector<8x128xf32>
    %367 = vector.broadcast %60 : vector<8x1xf32> to vector<8x128xf32>
    %368 = arith.mulf %367, %366 : vector<8x128xf32>
    %369 = arith.addf %359, %368 : vector<8x128xf32>
    %cst_125 = arith.constant 6.000000e+01 : f32
    %370 = vector.broadcast %cst_125 : f32 to vector<8x128xf32>
    %371 = arith.maximumf %69, %370 : vector<8x128xf32>
    %372 = vector.broadcast %61 : vector<8x1xf32> to vector<8x128xf32>
    %373 = arith.mulf %372, %371 : vector<8x128xf32>
    %374 = arith.addf %364, %373 : vector<8x128xf32>
    %cst_126 = arith.constant 6.100000e+01 : f32
    %375 = vector.broadcast %cst_126 : f32 to vector<8x128xf32>
    %376 = arith.maximumf %69, %375 : vector<8x128xf32>
    %377 = vector.broadcast %62 : vector<8x1xf32> to vector<8x128xf32>
    %378 = arith.mulf %377, %376 : vector<8x128xf32>
    %379 = arith.addf %369, %378 : vector<8x128xf32>
    %cst_127 = arith.constant 6.200000e+01 : f32
    %380 = vector.broadcast %cst_127 : f32 to vector<8x128xf32>
    %381 = arith.maximumf %69, %380 : vector<8x128xf32>
    %382 = vector.broadcast %63 : vector<8x1xf32> to vector<8x128xf32>
    %383 = arith.mulf %382, %381 : vector<8x128xf32>
    %384 = arith.addf %374, %383 : vector<8x128xf32>
    %385 = arith.addf %384, %379 : vector<8x128xf32>
    %c0_128 = arith.constant 0 : index
    %386 = arith.index_cast %65 : i32 to index
    %387 = vector.load %arg3[%c0_128, %386] : memref<8x128xf32, #tpu.memory_space<vmem>>, vector<8x128xf32>
    tpu.vector_store %arg3[%c0_128, %386], %385 {strides = array<i32>} : memref<8x128xf32, #tpu.memory_space<vmem>>, vector<8x128xf32>,
    %c1_i32 = arith.constant 1 : i32
    return
  }
  func.func @transform_0(%arg0: i32) -> (i32, i32) {
    %c0_i32 = arith.constant 0 : i32
    %c0_i32_0 = arith.constant 0 : i32
    return %c0_i32, %arg0 : i32, i32
  }
  func.func @transform_1(%arg0: i32) -> (i32, i32) {
    %c0_i32 = arith.constant 0 : i32
    %c0_i32_0 = arith.constant 0 : i32
    %c0_i32_1 = arith.constant 0 : i32
    return %c0_i32, %c0_i32_0 : i32, i32
  }
  func.func @transform_2(%arg0: i32) -> (i32, i32) {
    %c0_i32 = arith.constant 0 : i32
    %c0_i32_0 = arith.constant 0 : i32
    return %c0_i32, %arg0 : i32, i32
  }
}

</mosaic_0001>

<llo_original>
// kernel: tpu_custom_call.1
$region0: #{tpu_custom_call.1}
  #allocation0 [shape = 'u32[]', space=smem, size = 0x4, offset = 0x4, fixed_abs, tag = 'smem constant byte address 0x4 - core index']
  #allocation1 [shape = 'u32[144,128]{1,0:T(1,128)}', space=vmem, size = 0x12000, scoped, tag = 'internal scratch']
  %s0 = inlined_call_operand.hbm [shape: f32[8,256], index: 0, kind: input, shape index: {}]
  %s1 = inlined_call_operand.hbm [shape: f32[8,64], index: 1, kind: input, shape index: {}]
  %s2 = inlined_call_operand.hbm [shape: f32[8,256], index: 2, kind: output, shape index: {}]
  %s3 = sld [smem:[#allocation0]]
  $region49: #{tpu_custom_call.1} parent=0
    _
  %s5 = ssub.s32 1, %s3
  %s6 = scalar_select 0, %s5, %s3
  $region1: #{tpu_custom_call.1} parent=0
    #allocation2 [shape = 'u8[8192]{0}', space=vmem, size = 0x2000, scoped, tag = 'input window, operand 0']
    #allocation3 [shape = 's32[2]{0}', space=sflag, size = 0x8, scoped, tag = 'scoped memory for tpu_custom_call.1']
    #allocation4 [shape = 's32[2]{0}', space=sflag, size = 0x8, scoped, tag = 'scoped memory for tpu_custom_call.1']
    #allocation5 [shape = 'u8[4096]{0}', space=vmem, size = 0x1000, scoped, tag = 'input window, operand 1, single buffered']
    #allocation6 [shape = 's32[1]{0}', space=sflag, size = 0x4, scoped, tag = 'scoped memory for tpu_custom_call.1']
    #allocation7 [shape = 'u8[8192]{0}', space=vmem, size = 0x2000, scoped, tag = 'output window, operand 0']
    %7 = vsyncpa [#allocation3], 0
    %s8 = scalar_lea.sflag [#allocation3], 1
    %9 = vsyncpa %s8, 0
    %10 = vsyncpa [#allocation6], 0
    %11 = vsyncpa [#allocation4], 0
    %s12 = scalar_lea.sflag [#allocation4], 1
    %13 = vsyncpa %s12, 0
    loop: start=0, step=1, limit=4
    $region2: #{tpu_custom_call.1} parent=1 // loop_pre_header
      _
    $region3: #{tpu_custom_call.1} parent=1 // loop_header
      %s15 = sphi 0, %s19
      %p16 = scmp.ge.s32.totalorder %s15, 4
      %s25 = sphi 0, %s27
      %s28 = sphi 0, %s25
      %s29 = sphi 0, %s28
      %s45 = sphi 0, %s29
      %s49 = sphi 0, %s49
      %s51 = sphi 0, %s49
      %s52 = sphi 0, %s51
      %s66 = sphi 0, %s52
      %s72 = sphi 0, %s74
      %s75 = sphi 0, %s72
      %s76 = sphi 0, %s75
      %s92 = sphi 0, %s76
    $region4: #{tpu_custom_call.1} parent=1 // loop_header_branch
      %18 = sbr.rel (%p16) target = $region8
    $region5: #{tpu_custom_call.1} parent=1 // loop_body
      %s20 = ssub.s32 %s15, 1
      %s21 = ssub.s32 %s15, 2
      %s22 = sadd.s32 %s15, 1
      %s23 = ssub.s32 %s15, %s22
      %p24 = scmp.eq.s32.totalorder %s23, 0
      %s26 = sadd.s32 %s25, 1
      %s27 = scalar_select %p24, %s25, %s26
      %p30 = pneg %p24
      %p31 = scmp.eq.s32.totalorder %s15, 1
      %p32 = por %p30, %p31
      %p33 = scmp.ne.s32.totalorder %s25, %s28
      %p34 = scmp.eq.s32.totalorder %s15, 0
      %p35 = por %p33, %p34
      %p36 = scmp.ne.s32.totalorder %s25, %s28
      %p37 = scmp.eq.s32.totalorder %s20, 1
      %p38 = por %p36, %p37
      %p39 = scmp.ne.s32.totalorder %s28, %s29
      %p40 = scmp.eq.s32.totalorder %s20, 0
      %p41 = por %p39, %p40
      %p42 = scmp.ne.s32.totalorder %s28, %s29
      %p43 = scmp.eq.s32.totalorder %s21, 1
      %p44 = por %p42, %p43
      %p46 = scmp.ne.s32.totalorder %s29, %s45
      %p47 = scmp.eq.s32.totalorder %s21, 0
      %p48 = por %p46, %p47
      %s50 = sadd.s32 %s49, 1
      %p53 = scmp.eq.s32.totalorder %s15, 1
      %p54 = scmp.ne.s32.totalorder %s49, %s51
      %p55 = scmp.eq.s32.totalorder %s15, 0
      %p56 = por %p54, %p55
      %p57 = scmp.ne.s32.totalorder %s49, %s51
      %p58 = scmp.eq.s32.totalorder %s20, 1
      %p59 = por %p57, %p58
      %p60 = scmp.ne.s32.totalorder %s51, %s52
      %p61 = scmp.eq.s32.totalorder %s20, 0
      %p62 = por %p60, %p61
      %p63 = scmp.ne.s32.totalorder %s51, %s52
      %p64 = scmp.eq.s32.totalorder %s21, 1
      %p65 = por %p63, %p64
      %p67 = scmp.ne.s32.totalorder %s52, %s66
      %p68 = scmp.eq.s32.totalorder %s21, 0
      %p69 = por %p67, %p68
      %s70 = ssub.s32 %s15, %s22
      %p71 = scmp.eq.s32.totalorder %s70, 0
      %s73 = sadd.s32 %s72, 1
      %s74 = scalar_select %p71, %s72, %s73
      %p77 = pneg %p71
      %p78 = scmp.eq.s32.totalorder %s15, 1
      %p79 = por %p77, %p78
      %p80 = scmp.ne.s32.totalorder %s72, %s75
      %p81 = scmp.eq.s32.totalorder %s15, 0
      %p82 = por %p80, %p81
      %p83 = scmp.ne.s32.totalorder %s72, %s75
      %p84 = scmp.eq.s32.totalorder %s20, 1
      %p85 = por %p83, %p84
      %p86 = scmp.ne.s32.totalorder %s75, %s76
      %p87 = scmp.eq.s32.totalorder %s20, 0
      %p88 = por %p86, %p87
      %p89 = scmp.ne.s32.totalorder %s75, %s76
      %p90 = scmp.eq.s32.totalorder %s21, 1
      %p91 = por %p89, %p90
      %p93 = scmp.ne.s32.totalorder %s76, %s92
      %p94 = scmp.eq.s32.totalorder %s21, 0
      %p95 = por %p93, %p94
      %p96 = scmp.le.s32.totalorder 1, %s15
      %p97 = scmp.lt.s32.totalorder %s15, 3
      %p98 = pnand %p96, %p97
      %p99 = pneg %p98
      // Predicated region
      $region9: #{tpu_custom_call.1} parent=5 // pred_check
        _
      $region10: #{tpu_custom_call.1} parent=5 // pred_check_branch
        %101 = sbr.rel (%p98) target = $region12
      $region11: #{tpu_custom_call.1} parent=5 // pred_region
        %s102 = ssub.s32 %s15, 1
        // Predicated region
        $region13: #{tpu_custom_call.1} parent=11 // pred_check
          %p103 = pneg %p62
        $region14: #{tpu_custom_call.1} parent=11 // pred_check_branch
          %105 = sbr.rel (%p103) target = $region16
        $region15: #{tpu_custom_call.1} parent=11 // pred_region
          %s107 = ssub.s32 128, 128
          %108 = vsyncadd [#allocation6], %s107
          %s110 = sshll.u32 [#allocation5], 4
          %s111 = int_to_ptr.vmem [resolvable:$true] %s110
          %113 = dma.hbm_to_vmem [thread:$0]  %s1, 128, %s111, [#allocation6]
        $region16: #{tpu_custom_call.1} parent=11 // pred_fallthru
          _
      $region12: #{tpu_custom_call.1} parent=5 // pred_fallthru
        _
      %p114 = scmp.lt.s32.totalorder %s15, 2
      // Predicated region
      $region17: #{tpu_custom_call.1} parent=5 // pred_check
        %p115 = pneg %p114
      $region18: #{tpu_custom_call.1} parent=5 // pred_check_branch
        %117 = sbr.rel (%p115) target = $region20
      $region19: #{tpu_custom_call.1} parent=5 // pred_region
        // Predicated region
        $region21: #{tpu_custom_call.1} parent=19 // pred_check
          %p118 = pneg %p35
        $region22: #{tpu_custom_call.1} parent=19 // pred_check_branch
          %120 = sbr.rel (%p118) target = $region24
        $region23: #{tpu_custom_call.1} parent=19 // pred_region
          %s121 = sand.u32 %s25, 1
          %s122 = scalar_lea.sflag [#allocation3], %s121
          %s123 = sand.u32 %s25, 1
          %s124 = smul.addr %s123, 8
          %s125 = scalar_lea.vmem [#allocation2], %s124
          %s127 = ssub.s32 128, 128
          %128 = vsyncadd %s122, %s127
          %s129 = smul.addr %s15, 128
          %s130 = scalar_lea.hbm %s0, %s129
          %s132 = sshll.u32 %s125, 4
          %s133 = int_to_ptr.vmem [resolvable:$true] %s132
          %135 = dma.hbm_to_vmem [thread:$0]  %s130, 128, %s133, %s122
        $region24: #{tpu_custom_call.1} parent=19 // pred_fallthru
          _
      $region20: #{tpu_custom_call.1} parent=5 // pred_fallthru
        _
      %p136 = scmp.le.s32.totalorder 1, %s15
      %p137 = scmp.lt.s32.totalorder %s15, 3
      %p138 = pnand %p136, %p137
      %p139 = pneg %p138
      // Predicated region
      $region25: #{tpu_custom_call.1} parent=5 // pred_check
        _
      $region26: #{tpu_custom_call.1} parent=5 // pred_check_branch
        %141 = sbr.rel (%p138) target = $region28
      $region27: #{tpu_custom_call.1} parent=5 // pred_region
        %s142 = ssub.s32 %s15, 1
        %s143 = sand.u32 %s28, 1
        %s144 = scalar_lea.sflag [#allocation3], %s143
        %s145 = sand.u32 %s28, 1
        %s146 = smul.addr %s145, 8
        %s147 = scalar_lea.vmem [#allocation2], %s146
        // Predicated region
        $region29: #{tpu_custom_call.1} parent=27 // pred_check
          %p148 = pneg %p41
        $region30: #{tpu_custom_call.1} parent=27 // pred_check_branch
          %150 = sbr.rel (%p148) target = $region32
        $region31: #{tpu_custom_call.1} parent=27 // pred_region
          %151 = dma.done %s144, 128
        $region32: #{tpu_custom_call.1} parent=27 // pred_fallthru
          _
        // Predicated region
        $region33: #{tpu_custom_call.1} parent=27 // pred_check
          %p152 = pneg %p62
        $region34: #{tpu_custom_call.1} parent=27 // pred_check_branch
          %154 = sbr.rel (%p152) target = $region36
        $region35: #{tpu_custom_call.1} parent=27 // pred_region
          %155 = dma.done [#allocation6], 128
        $region36: #{tpu_custom_call.1} parent=27 // pred_fallthru
          _
        %s156 = sand.u32 %s28, 1
        %s157 = scalar_lea.sflag [#allocation3], %s156
        %s158 = sand.u32 %s28, 1
        %s159 = smul.addr %s158, 8
        %s160 = scalar_lea.vmem [#allocation2], %s159
        %p161 = pneg %p41
        %p162 = pneg %p38
        %p163 = pneg %p62
        %p164 = pneg %p59
        %p165 = pneg %p88
        %p166 = pneg %p85
        %s167 = sand.u32 %s75, 1
        %s168 = scalar_lea.sflag [#allocation4], %s167
        %s169 = sand.u32 %s75, 1
        %s170 = smul.addr %s169, 8
        %s171 = scalar_lea.vmem [#allocation7], %s170
        %v172 = vld [vmem:[#allocation5] sm:$0xff]
        %v173 = vld [vmem:[%s147] sm:$0xff]
        %v174 = vmul.f32 %v173, 63.0
        %176 = vset.pattern.permute.xlu0 1
        %177 = vperm.xlu0 %176, %v172
        %v178 = vpop.permute.xlu0 %177
        %v180 = vmul.f32 %v178, %v174
        %181 = vset.pattern.permute.xlu0 0
        %182 = vperm.xlu0 %181, %v172
        %v183 = vpop.permute.xlu0 %182
        %v185 = vadd.f32 %v183, %v180
        %v186 = vmax.f32 %v174, 1.0
        %187 = vset.pattern.permute.xlu0 2
        %188 = vperm.xlu0 %187, %v172
        %v189 = vpop.permute.xlu0 %188
        %v191 = vmul.f32 %v189, %v186
        %v192 = vadd.f32 %v191, 0.0
        %v193 = vmax.f32 %v174, 2.0
        %194 = vset.pattern.permute.xlu0 3
        %195 = vperm.xlu0 %194, %v172
        %v196 = vpop.permute.xlu0 %195
        %v198 = vmul.f32 %v196, %v193
        %v199 = vadd.f32 %v185, %v198
        %v200 = vmax.f32 %v174, 3.0
        %201 = vset.pattern.permute.xlu0 4
        %202 = vperm.xlu0 %201, %v172
        %v203 = vpop.permute.xlu0 %202
        %v205 = vmul.f32 %v203, %v200
        %v206 = vadd.f32 %v192, %v205
        %v207 = vmax.f32 %v174, 4.0
        %208 = vset.pattern.permute.xlu0 5
        %209 = vperm.xlu0 %208, %v172
        %v210 = vpop.permute.xlu0 %209
        %v212 = vmul.f32 %v210, %v207
        %v213 = vadd.f32 %v199, %v212
        %v214 = vmax.f32 %v174, 5.0
        %215 = vset.pattern.permute.xlu0 6
        %216 = vperm.xlu0 %215, %v172
        %v217 = vpop.permute.xlu0 %216
        %v219 = vmul.f32 %v217, %v214
        %v220 = vadd.f32 %v206, %v219
        %v221 = vmax.f32 %v174, 6.0
        %222 = vset.pattern.permute.xlu0 7
        %223 = vperm.xlu0 %222, %v172
        %v224 = vpop.permute.xlu0 %223
        %v226 = vmul.f32 %v224, %v221
        %v227 = vadd.f32 %v213, %v226
        %v228 = vmax.f32 %v174, 7.0
        %229 = vset.pattern.permute.xlu0 8
        %230 = vperm.xlu0 %229, %v172
        %v231 = vpop.permute.xlu0 %230
        %v233 = vmul.f32 %v231, %v228
        %v234 = vadd.f32 %v220, %v233
        %v235 = vmax.f32 %v174, 8.0
        %236 = vset.pattern.permute.xlu0 9
        %237 = vperm.xlu0 %236, %v172
        %v238 = vpop.permute.xlu0 %237
        %v240 = vmul.f32 %v238, %v235
        %v241 = vadd.f32 %v227, %v240
        %v242 = vmax.f32 %v174, 9.0
        %243 = vset.pattern.permute.xlu0 10
        %244 = vperm.xlu0 %243, %v172
        %v245 = vpop.permute.xlu0 %244
        %v247 = vmul.f32 %v245, %v242
        %v248 = vadd.f32 %v234, %v247
        %v249 = vmax.f32 %v174, 10.0
        %250 = vset.pattern.permute.xlu0 11
        %251 = vperm.xlu0 %250, %v172
        %v252 = vpop.permute.xlu0 %251
        %v254 = vmul.f32 %v252, %v249
        %v255 = vadd.f32 %v241, %v254
        %v256 = vmax.f32 %v174, 11.0
        %257 = vset.pattern.permute.xlu0 12
        %258 = vperm.xlu0 %257, %v172
        %v259 = vpop.permute.xlu0 %258
        %v261 = vmul.f32 %v259, %v256
        %v262 = vadd.f32 %v248, %v261
        %v263 = vmax.f32 %v174, 12.0
        %264 = vset.pattern.permute.xlu0 13
        %265 = vperm.xlu0 %264, %v172
        %v266 = vpop.permute.xlu0 %265
        %v268 = vmul.f32 %v266, %v263
        %v269 = vadd.f32 %v255, %v268
        %v270 = vmax.f32 %v174, 13.0
        %271 = vset.pattern.permute.xlu0 14
        %272 = vperm.xlu0 %271, %v172
        %v273 = vpop.permute.xlu0 %272
        %v275 = vmul.f32 %v273, %v270
        %v276 = vadd.f32 %v262, %v275
        %v277 = vmax.f32 %v174, 14.0
        %278 = vset.pattern.permute.xlu0 15
        %279 = vperm.xlu0 %278, %v172
        %v280 = vpop.permute.xlu0 %279
        %v282 = vmul.f32 %v280, %v277
        %v283 = vadd.f32 %v269, %v282
        %v284 = vmax.f32 %v174, 15.0
        %285 = vset.pattern.permute.xlu0 16
        %286 = vperm.xlu0 %285, %v172
        %v287 = vpop.permute.xlu0 %286
        %v289 = vmul.f32 %v287, %v284
        %v290 = vadd.f32 %v276, %v289
        %v291 = vmax.f32 %v174, 16.0
        %292 = vset.pattern.permute.xlu0 17
        %293 = vperm.xlu0 %292, %v172
        %v294 = vpop.permute.xlu0 %293
        %v296 = vmul.f32 %v294, %v291
        %v297 = vadd.f32 %v283, %v296
        %v298 = vmax.f32 %v174, 17.0
        %299 = vset.pattern.permute.xlu0 18
        %300 = vperm.xlu0 %299, %v172
        %v301 = vpop.permute.xlu0 %300
        %v303 = vmul.f32 %v301, %v298
        %v304 = vadd.f32 %v290, %v303
        %v305 = vmax.f32 %v174, 18.0
        %306 = vset.pattern.permute.xlu0 19
        %307 = vperm.xlu0 %306, %v172
        %v308 = vpop.permute.xlu0 %307
        %v310 = vmul.f32 %v308, %v305
        %v311 = vadd.f32 %v297, %v310
        %v312 = vmax.f32 %v174, 19.0
        %313 = vset.pattern.permute.xlu0 20
        %314 = vperm.xlu0 %313, %v172
        %v315 = vpop.permute.xlu0 %314
        %v317 = vmul.f32 %v315, %v312
        %v318 = vadd.f32 %v304, %v317
        %v319 = vmax.f32 %v174, 20.0
        %320 = vset.pattern.permute.xlu0 21
        %321 = vperm.xlu0 %320, %v172
        %v322 = vpop.permute.xlu0 %321
        %v324 = vmul.f32 %v322, %v319
        %v325 = vadd.f32 %v311, %v324
        %v326 = vmax.f32 %v174, 21.0
        %327 = vset.pattern.permute.xlu0 22
        %328 = vperm.xlu0 %327, %v172
        %v329 = vpop.permute.xlu0 %328
        %v331 = vmul.f32 %v329, %v326
        %v332 = vadd.f32 %v318, %v331
        %v333 = vmax.f32 %v174, 22.0
        %334 = vset.pattern.permute.xlu0 23
        %335 = vperm.xlu0 %334, %v172
        %v336 = vpop.permute.xlu0 %335
        %v338 = vmul.f32 %v336, %v333
        %v339 = vadd.f32 %v325, %v338
        %v340 = vmax.f32 %v174, 23.0
        %341 = vset.pattern.permute.xlu0 24
        %342 = vperm.xlu0 %341, %v172
        %v343 = vpop.permute.xlu0 %342
        %v345 = vmul.f32 %v343, %v340
        %v346 = vadd.f32 %v332, %v345
        %v347 = vmax.f32 %v174, 24.0
        %348 = vset.pattern.permute.xlu0 25
        %349 = vperm.xlu0 %348, %v172
        %v350 = vpop.permute.xlu0 %349
        %v352 = vmul.f32 %v350, %v347
        %v353 = vadd.f32 %v339, %v352
        %v354 = vmax.f32 %v174, 25.0
        %355 = vset.pattern.permute.xlu0 26
        %356 = vperm.xlu0 %355, %v172
        %v357 = vpop.permute.xlu0 %356
        %v359 = vmul.f32 %v357, %v354
        %v360 = vadd.f32 %v346, %v359
        %v361 = vmax.f32 %v174, 26.0
        %362 = vset.pattern.permute.xlu0 27
        %363 = vperm.xlu0 %362, %v172
        %v364 = vpop.permute.xlu0 %363
        %v366 = vmul.f32 %v364, %v361
        %v367 = vadd.f32 %v353, %v366
        %v368 = vmax.f32 %v174, 27.0
        %369 = vset.pattern.permute.xlu0 28
        %370 = vperm.xlu0 %369, %v172
        %v371 = vpop.permute.xlu0 %370
        %v373 = vmul.f32 %v371, %v368
        %v374 = vadd.f32 %v360, %v373
        %v375 = vmax.f32 %v174, 28.0
        %376 = vset.pattern.permute.xlu0 29
        %377 = vperm.xlu0 %376, %v172
        %v378 = vpop.permute.xlu0 %377
        %v380 = vmul.f32 %v378, %v375
        %v381 = vadd.f32 %v367, %v380
        %v382 = vmax.f32 %v174, 29.0
        %383 = vset.pattern.permute.xlu0 30
        %384 = vperm.xlu0 %383, %v172
        %v385 = vpop.permute.xlu0 %384
        %v387 = vmul.f32 %v385, %v382
        %v388 = vadd.f32 %v374, %v387
        %v389 = vmax.f32 %v174, 30.0
        %390 = vset.pattern.permute.xlu0 31
        %391 = vperm.xlu0 %390, %v172
        %v392 = vpop.permute.xlu0 %391
        %v394 = vmul.f32 %v392, %v389
        %v395 = vadd.f32 %v381, %v394
        %v396 = vmax.f32 %v174, 31.0
        %397 = vset.pattern.permute.xlu0 32
        %398 = vperm.xlu0 %397, %v172
        %v399 = vpop.permute.xlu0 %398
        %v401 = vmul.f32 %v399, %v396
        %v402 = vadd.f32 %v388, %v401
        %v403 = vmax.f32 %v174, 32.0
        %404 = vset.pattern.permute.xlu0 33
        %405 = vperm.xlu0 %404, %v172
        %v406 = vpop.permute.xlu0 %405
        %v408 = vmul.f32 %v406, %v403
        %v409 = vadd.f32 %v395, %v408
        %v410 = vmax.f32 %v174, 33.0
        %411 = vset.pattern.permute.xlu0 34
        %412 = vperm.xlu0 %411, %v172
        %v413 = vpop.permute.xlu0 %412
        %v415 = vmul.f32 %v413, %v410
        %v416 = vadd.f32 %v402, %v415
        %v417 = vmax.f32 %v174, 34.0
        %418 = vset.pattern.permute.xlu0 35
        %419 = vperm.xlu0 %418, %v172
        %v420 = vpop.permute.xlu0 %419
        %v422 = vmul.f32 %v420, %v417
        %v423 = vadd.f32 %v409, %v422
        %v424 = vmax.f32 %v174, 35.0
        %425 = vset.pattern.permute.xlu0 36
        %426 = vperm.xlu0 %425, %v172
        %v427 = vpop.permute.xlu0 %426
        %v429 = vmul.f32 %v427, %v424
        %v430 = vadd.f32 %v416, %v429
        %v431 = vmax.f32 %v174, 36.0
        %432 = vset.pattern.permute.xlu0 37
        %433 = vperm.xlu0 %432, %v172
        %v434 = vpop.permute.xlu0 %433
        %v436 = vmul.f32 %v434, %v431
        %v437 = vadd.f32 %v423, %v436
        %v438 = vmax.f32 %v174, 37.0
        %439 = vset.pattern.permute.xlu0 38
        %440 = vperm.xlu0 %439, %v172
        %v441 = vpop.permute.xlu0 %440
        %v443 = vmul.f32 %v441, %v438
        %v444 = vadd.f32 %v430, %v443
        %v445 = vmax.f32 %v174, 38.0
        %446 = vset.pattern.permute.xlu0 39
        %447 = vperm.xlu0 %446, %v172
        %v448 = vpop.permute.xlu0 %447
        %v450 = vmul.f32 %v448, %v445
        %v451 = vadd.f32 %v437, %v450
        %v452 = vmax.f32 %v174, 39.0
        %453 = vset.pattern.permute.xlu0 40
        %454 = vperm.xlu0 %453, %v172
        %v455 = vpop.permute.xlu0 %454
        %v457 = vmul.f32 %v455, %v452
        %v458 = vadd.f32 %v444, %v457
        %v459 = vmax.f32 %v174, 40.0
        %460 = vset.pattern.permute.xlu0 41
        %461 = vperm.xlu0 %460, %v172
        %v462 = vpop.permute.xlu0 %461
        %v464 = vmul.f32 %v462, %v459
        %v465 = vadd.f32 %v451, %v464
        %v466 = vmax.f32 %v174, 41.0
        %467 = vset.pattern.permute.xlu0 42
        %468 = vperm.xlu0 %467, %v172
        %v469 = vpop.permute.xlu0 %468
        %v471 = vmul.f32 %v469, %v466
        %v472 = vadd.f32 %v458, %v471
        %v473 = vmax.f32 %v174, 42.0
        %474 = vset.pattern.permute.xlu0 43
        %475 = vperm.xlu0 %474, %v172
        %v476 = vpop.permute.xlu0 %475
        %v478 = vmul.f32 %v476, %v473
        %v479 = vadd.f32 %v465, %v478
        %v480 = vmax.f32 %v174, 43.0
        %481 = vset.pattern.permute.xlu0 44
        %482 = vperm.xlu0 %481, %v172
        %v483 = vpop.permute.xlu0 %482
        %v485 = vmul.f32 %v483, %v480
        %v486 = vadd.f32 %v472, %v485
        %v487 = vmax.f32 %v174, 44.0
        %488 = vset.pattern.permute.xlu0 45
        %489 = vperm.xlu0 %488, %v172
        %v490 = vpop.permute.xlu0 %489
        %v492 = vmul.f32 %v490, %v487
        %v493 = vadd.f32 %v479, %v492
        %v494 = vmax.f32 %v174, 45.0
        %495 = vset.pattern.permute.xlu0 46
        %496 = vperm.xlu0 %495, %v172
        %v497 = vpop.permute.xlu0 %496
        %v499 = vmul.f32 %v497, %v494
        %v500 = vadd.f32 %v486, %v499
        %v501 = vmax.f32 %v174, 46.0
        %502 = vset.pattern.permute.xlu0 47
        %503 = vperm.xlu0 %502, %v172
        %v504 = vpop.permute.xlu0 %503
        %v506 = vmul.f32 %v504, %v501
        %v507 = vadd.f32 %v493, %v506
        %v508 = vmax.f32 %v174, 47.0
        %509 = vset.pattern.permute.xlu0 48
        %510 = vperm.xlu0 %509, %v172
        %v511 = vpop.permute.xlu0 %510
        %v513 = vmul.f32 %v511, %v508
        %v514 = vadd.f32 %v500, %v513
        %v515 = vmax.f32 %v174, 48.0
        %516 = vset.pattern.permute.xlu0 49
        %517 = vperm.xlu0 %516, %v172
        %v518 = vpop.permute.xlu0 %517
        %v520 = vmul.f32 %v518, %v515
        %v521 = vadd.f32 %v507, %v520
        %v522 = vmax.f32 %v174, 49.0
        %523 = vset.pattern.permute.xlu0 50
        %524 = vperm.xlu0 %523, %v172
        %v525 = vpop.permute.xlu0 %524
        %v527 = vmul.f32 %v525, %v522
        %v528 = vadd.f32 %v514, %v527
        %v529 = vmax.f32 %v174, 50.0
        %530 = vset.pattern.permute.xlu0 51
        %531 = vperm.xlu0 %530, %v172
        %v532 = vpop.permute.xlu0 %531
        %v534 = vmul.f32 %v532, %v529
        %v535 = vadd.f32 %v521, %v534
        %v536 = vmax.f32 %v174, 51.0
        %537 = vset.pattern.permute.xlu0 52
        %538 = vperm.xlu0 %537, %v172
        %v539 = vpop.permute.xlu0 %538
        %v541 = vmul.f32 %v539, %v536
        %v542 = vadd.f32 %v528, %v541
        %v543 = vmax.f32 %v174, 52.0
        %544 = vset.pattern.permute.xlu0 53
        %545 = vperm.xlu0 %544, %v172
        %v546 = vpop.permute.xlu0 %545
        %v548 = vmul.f32 %v546, %v543
        %v549 = vadd.f32 %v535, %v548
        %v550 = vmax.f32 %v174, 53.0
        %551 = vset.pattern.permute.xlu0 54
        %552 = vperm.xlu0 %551, %v172
        %v553 = vpop.permute.xlu0 %552
        %v555 = vmul.f32 %v553, %v550
        %v556 = vadd.f32 %v542, %v555
        %v557 = vmax.f32 %v174, 54.0
        %558 = vset.pattern.permute.xlu0 55
        %559 = vperm.xlu0 %558, %v172
        %v560 = vpop.permute.xlu0 %559
        %v562 = vmul.f32 %v560, %v557
        %v563 = vadd.f32 %v549, %v562
        %v564 = vmax.f32 %v174, 55.0
        %565 = vset.pattern.permute.xlu0 56
        %566 = vperm.xlu0 %565, %v172
        %v567 = vpop.permute.xlu0 %566
        %v569 = vmul.f32 %v567, %v564
        %v570 = vadd.f32 %v556, %v569
        %v571 = vmax.f32 %v174, 56.0
        %572 = vset.pattern.permute.xlu0 57
        %573 = vperm.xlu0 %572, %v172
        %v574 = vpop.permute.xlu0 %573
        %v576 = vmul.f32 %v574, %v571
        %v577 = vadd.f32 %v563, %v576
        %v578 = vmax.f32 %v174, 57.0
        %579 = vset.pattern.permute.xlu0 58
        %580 = vperm.xlu0 %579, %v172
        %v581 = vpop.permute.xlu0 %580
        %v583 = vmul.f32 %v581, %v578
        %v584 = vadd.f32 %v570, %v583
        %v585 = vmax.f32 %v174, 58.0
        %586 = vset.pattern.permute.xlu0 59
        %587 = vperm.xlu0 %586, %v172
        %v588 = vpop.permute.xlu0 %587
        %v590 = vmul.f32 %v588, %v585
        %v591 = vadd.f32 %v577, %v590
        %v592 = vmax.f32 %v174, 59.0
        %593 = vset.pattern.permute.xlu0 60
        %594 = vperm.xlu0 %593, %v172
        %v595 = vpop.permute.xlu0 %594
        %v597 = vmul.f32 %v595, %v592
        %v598 = vadd.f32 %v584, %v597
        %v599 = vmax.f32 %v174, 60.0
        %600 = vset.pattern.permute.xlu0 61
        %601 = vperm.xlu0 %600, %v172
        %v602 = vpop.permute.xlu0 %601
        %v604 = vmul.f32 %v602, %v599
        %v605 = vadd.f32 %v591, %v604
        %v606 = vmax.f32 %v174, 61.0
        %607 = vset.pattern.permute.xlu0 62
        %608 = vperm.xlu0 %607, %v172
        %v609 = vpop.permute.xlu0 %608
        %v611 = vmul.f32 %v609, %v606
        %v612 = vadd.f32 %v598, %v611
        %v613 = vmax.f32 %v174, 62.0
        %614 = vset.pattern.permute.xlu0 63
        %615 = vperm.xlu0 %614, %v172
        %v616 = vpop.permute.xlu0 %615
        %v618 = vmul.f32 %v616, %v613
        %v619 = vadd.f32 %v605, %v618
        %v620 = vadd.f32 %v619, %v612
        %621 = vst [vmem:[%s171] sm:$0xff] %v620
        %s622 = sand.u32 %s75, 1
        %s623 = scalar_lea.sflag [#allocation4], %s622
        %s624 = sand.u32 %s75, 1
        %s625 = smul.addr %s624, 8
        %s626 = scalar_lea.vmem [#allocation7], %s625
        // Predicated region
        $region37: #{tpu_custom_call.1} parent=27 // pred_check
          %p627 = pneg %p85
        $region38: #{tpu_custom_call.1} parent=27 // pred_check_branch
          %629 = sbr.rel (%p627) target = $region40
        $region39: #{tpu_custom_call.1} parent=27 // pred_region
          %s631 = ssub.s32 128, 128
          %632 = vsyncadd %s623, %s631
          %s633 = smul.addr %s20, 128
          %s634 = scalar_lea.hbm %s2, %s633
          %s636 = sshll.u32 %s626, 4
          %s637 = int_to_ptr.vmem [resolvable:$true] %s636
          %639 = dma.vmem_to_hbm [thread:$0]  %s637, 128, %s634, %s623
        $region40: #{tpu_custom_call.1} parent=27 // pred_fallthru
          _
      $region28: #{tpu_custom_call.1} parent=5 // pred_fallthru
        _
      %p640 = scmp.le.s32.totalorder 2, %s15
      // Predicated region
      $region41: #{tpu_custom_call.1} parent=5 // pred_check
        %p641 = pneg %p640
      $region42: #{tpu_custom_call.1} parent=5 // pred_check_branch
        %643 = sbr.rel (%p641) target = $region44
      $region43: #{tpu_custom_call.1} parent=5 // pred_region
        %s644 = ssub.s32 %s15, 2
        // Predicated region
        $region45: #{tpu_custom_call.1} parent=43 // pred_check
          %p645 = pneg %p91
        $region46: #{tpu_custom_call.1} parent=43 // pred_check_branch
          %647 = sbr.rel (%p645) target = $region48
        $region47: #{tpu_custom_call.1} parent=43 // pred_region
          %s648 = sand.u32 %s76, 1
          %s649 = scalar_lea.sflag [#allocation4], %s648
          %s650 = sand.u32 %s76, 1
          %s651 = smul.addr %s650, 8
          %s652 = scalar_lea.vmem [#allocation7], %s651
          %653 = dma.done %s649, 128
        $region48: #{tpu_custom_call.1} parent=43 // pred_fallthru
          _
      $region44: #{tpu_custom_call.1} parent=5 // pred_fallthru
        _
    $region6: #{tpu_custom_call.1} parent=1 // loop_footer
      %s19 = sadd.s32 1, %s15
    $region7: #{tpu_custom_call.1} parent=1 // loop_footer_branch
      %14 = sbr.rel target = $region3
    $region8: #{tpu_custom_call.1} parent=1 // loop_exit
      _
    %654 = vsyncpa [#allocation3], 1
    %s655 = scalar_lea.sflag [#allocation3], 1
    %656 = vsyncpa %s655, 1
    %657 = vsyncpa [#allocation6], 1
    %658 = vsyncpa [#allocation4], 1
    %s659 = scalar_lea.sflag [#allocation4], 1
    %660 = vsyncpa %s659, 1

</llo_original>
